<compile_context>
chip_gen: v7x
topology: tpu7x:2x2x1
jax: 0.10.0
libtpu: 0.0.40
codegen_flags: <defaults>
</compile_context>

<pallas_src>
import jax
import jax.numpy as jnp
from jax import lax
from jax.experimental import pallas as pl
from jax.experimental.pallas import tpu as pltpu


def _round_up(n, m):
    return ((n + m - 1) // m) * m


def rnn_classifier_kernel(emb_ref, wih_ref, whh_ref, bias_ref, wfc_ref, bfc_ref,
                          out_ref, xproj_ref):
    # emb_ref  : (T, B_block, E) bf16  time-major batch block
    # wih_ref  : (E, H)  bf16  = W_ih^T
    # whh_ref  : (H, H)  bf16  = W_hh^T
    # bias_ref : (1, H)  f32   = b_ih + b_hh
    # wfc_ref  : (H, O_pad) bf16 = W_fc^T, columns padded to 128
    # bfc_ref  : (1, O_pad) f32
    # out_ref  : (B_block, O_pad) f32
    # xproj_ref: (T*B_block, H) f32 VMEM scratch
    T, b_block, E = emb_ref.shape
    H = whh_ref.shape[0]

    # Hoisted input projection for all T steps of this batch block:
    # ONE well-shaped MXU matmul; written once to VMEM scratch.
    emb = emb_ref[...].reshape(T * b_block, E)
    xproj_ref[...] = (
        jnp.dot(emb, wih_ref[...], preferred_element_type=jnp.float32)
        + bias_ref[...]
    )

    whh = whh_ref[...]  # bf16, loaded once, reused across the recurrence

    def step(t, h):
        # h stays an f32 vreg-carried value; only the dot operand is cast.
        start = pl.multiple_of(t * b_block, 8)
        x_t = xproj_ref[pl.ds(start, b_block), :]          # (B_block, H) f32
        hp = jnp.dot(h.astype(whh.dtype), whh,
                     preferred_element_type=jnp.float32)
        return jnp.tanh(x_t + hp)

    h = lax.fori_loop(0, T, step,
                      jnp.zeros((b_block, H), jnp.float32), unroll=True)

    # Final linear; lane-dense (O_pad = multiple of 128) unmasked store.
    out_ref[...] = (
        jnp.dot(h.astype(wfc_ref.dtype), wfc_ref[...],
                preferred_element_type=jnp.float32)
        + bfc_ref[...]
    )


def _choose_block_and_vmem(B, T, E, H, O_pad):
    """Pick the batch block (256-row MXU target on v6e/v7x) under a VMEM budget."""
    def footprint(bb):
        emb = 2 * T * bb * E * 2                      # bf16 input, double-buffered
        xproj = T * bb * H * 4                        # f32 scratch
        outb = 2 * bb * O_pad * 4                     # f32 output, double-buffered
        weights = 2 * ((E * H + H * H + H * O_pad) * 2 + (H + O_pad) * 4)
        return emb + xproj + outb + weights

    b_block = 256                                     # v6e/v7x MXU is 2x256x256
    while b_block > 8 and footprint(b_block) > 20 * 1024 * 1024:
        b_block //= 2                                 # keep well under v7x 64 MiB
    if B <= b_block:
        b_block = max(8, _round_up(B, 8))             # small batch: single block
    vmem_limit = min(max(2 * footprint(b_block) + (4 << 20), 16 << 20), 56 << 20)
    return b_block, vmem_limit


def prepare_params(params):
    """One-time weight prep: transpose + bf16 cast + lane-dense FC padding."""
    H = params["w_hh"].shape[0]
    O = params["w_fc"].shape[0]
    O_pad = _round_up(O, 128)
    w_fc_t = jnp.zeros((H, O_pad), jnp.bfloat16).at[:, :O].set(
        params["w_fc"].T.astype(jnp.bfloat16))
    b_fc_pad = jnp.zeros((1, O_pad), jnp.float32).at[0, :O].set(
        params["b_fc"].astype(jnp.float32))
    return {
        "emb_table": params["embedding"].astype(jnp.bfloat16),   # row 0 stays zero
        "w_ih_t": params["w_ih"].T.astype(jnp.bfloat16),          # (E, H)
        "w_hh_t": params["w_hh"].T.astype(jnp.bfloat16),          # (H, H)
        "rnn_bias": (params["b_ih"] + params["b_hh"])[None, :].astype(jnp.float32),
        "w_fc_t": w_fc_t,                                         # (H, O_pad)
        "b_fc_pad": b_fc_pad,                                     # (1, O_pad)
        "output_dim": O,
    }


def surname_classifier_forward(x, prep):
    """x: int32 token ids (B, T). Returns f32 logits (B, output_dim)."""
    B, T = x.shape
    E = prep["emb_table"].shape[1]
    H = prep["w_hh_t"].shape[0]
    O_pad = prep["w_fc_t"].shape[1]
    O = prep["output_dim"]

    b_block, vmem_limit = _choose_block_and_vmem(B, T, E, H, O_pad)
    B_pad = _round_up(B, b_block)
    if B_pad != B:
        # Padded rows use token id 0 -> zero embedding; their logits are dropped.
        x = jnp.pad(x, ((0, B_pad - B), (0, 0)))

    # Time-major gather straight into bf16 (halves HBM bytes of the big tensor).
    # TODO(synk): do this gather inside the kernel via scalar-prefetched ids.
    emb = jnp.take(prep["emb_table"], x.T, axis=0)        # (T, B_pad, E) bf16

    n_blocks = B_pad // b_block
    grid_spec = pltpu.PrefetchScalarGridSpec(
        num_scalar_prefetch=0,
        grid=(n_blocks,),
        in_specs=[
            pl.BlockSpec((T, b_block, E), lambda b: (0, b, 0)),
            pl.BlockSpec((E, H), lambda b: (0, 0)),
            pl.BlockSpec((H, H), lambda b: (0, 0)),
            pl.BlockSpec((1, H), lambda b: (0, 0)),
            pl.BlockSpec((H, O_pad), lambda b: (0, 0)),
            pl.BlockSpec((1, O_pad), lambda b: (0, 0)),
        ],
        out_specs=pl.BlockSpec((b_block, O_pad), lambda b: (b, 0)),
        scratch_shapes=[pltpu.VMEM((T * b_block, H), jnp.float32)],
    )

    out = pl.pallas_call(
        rnn_classifier_kernel,
        out_shape=jax.ShapeDtypeStruct((B_pad, O_pad), jnp.float32),
        grid_spec=grid_spec,
        compiler_params=pltpu.CompilerParams(
            dimension_semantics=("parallel",),   # batch blocks split across TCs (v7x)
            vmem_limit_bytes=int(vmem_limit),
        ),
    )(emb, prep["w_ih_t"], prep["w_hh_t"], prep["rnn_bias"],
      prep["w_fc_t"], prep["b_fc_pad"])

    return out[:B, :O]


def init_params(key, vocab_size, embed_dim, hidden_dim, output_dim):
    ks = jax.random.split(key, 7)
    emb = 0.1 * jax.random.normal(ks[0], (vocab_size, embed_dim), jnp.float32)
    emb = emb.at[0].set(0.0)  # padding_idx=0 row is zeros (matches nn.Embedding)
    return {
        "embedding": emb,
        "w_ih": 0.1 * jax.random.normal(ks[1], (hidden_dim, embed_dim), jnp.float32),
        "w_hh": 0.1 * jax.random.normal(ks[2], (hidden_dim, hidden_dim), jnp.float32),
        "b_ih": 0.1 * jax.random.normal(ks[3], (hidden_dim,), jnp.float32),
        "b_hh": 0.1 * jax.random.normal(ks[4], (hidden_dim,), jnp.float32),
        "w_fc": 0.1 * jax.random.normal(ks[5], (output_dim, hidden_dim), jnp.float32),
        "b_fc": 0.1 * jax.random.normal(ks[6], (output_dim,), jnp.float32),
    }


def reference_forward(x, params):
    """Pure-JAX f32 reference mirroring the PyTorch forward semantics."""
    emb = jnp.take(params["embedding"], x, axis=0)          # (B, T, E)
    B, T, _ = emb.shape
    H = params["w_hh"].shape[0]
    h = jnp.zeros((B, H), jnp.float32)
    for t in range(T):
        h = jnp.tanh(emb[:, t, :] @ params["w_ih"].T + params["b_ih"]
                     + h @ params["w_hh"].T + params["b_hh"])
    return h @ params["w_fc"].T + params["b_fc"]


if __name__ == "__main__":
    vocab_size, embed_dim, hidden_dim, output_dim = 32, 16, 32, 8
    batch, seq = 2, 8

    key = jax.random.PRNGKey(0)
    k_params, k_x = jax.random.split(key)
    params = init_params(k_params, vocab_size, embed_dim, hidden_dim, output_dim)
    prep = prepare_params(params)
    x = jax.random.randint(k_x, (batch, seq), 0, vocab_size, dtype=jnp.int32)

    out = surname_classifier_forward(x, prep)
    out = jax.block_until_ready(out)

    ref = reference_forward(x, params)
    assert out.shape == (batch, output_dim)
    # bf16 MXU operands with f32 accumulation vs. pure-f32 reference.
    assert jnp.allclose(out, ref, atol=2e-2, rtol=2e-2), \
        float(jnp.max(jnp.abs(out - ref)))
    print("KERNEL_OK")
</pallas_src>

<mosaic_0001>
module attributes {stable_mosaic.version = 11 : i64} {
  func.func @rnn_classifier_kernel(%arg0: i32, %arg1: memref<8x8x16xbf16, #tpu.memory_space<vmem>>, %arg2: memref<16x32xbf16, #tpu.memory_space<vmem>>, %arg3: memref<32x32xbf16, #tpu.memory_space<vmem>>, %arg4: memref<1x32xf32, #tpu.memory_space<vmem>>, %arg5: memref<32x128xbf16, #tpu.memory_space<vmem>>, %arg6: memref<1x128xf32, #tpu.memory_space<vmem>>, %arg7: memref<8x128xf32, #tpu.memory_space<vmem>>, %arg8: memref<64x32xf32, #tpu.memory_space<vmem>>) attributes {dimension_semantics = [#tpu.dimension_semantics<parallel>], iteration_bounds = array<i64: 1>, scalar_prefetch = 0 : i64, scratch_operands = 1 : i64, tpu.core_type = #tpu.core_type<tc>, window_params = [{transform_indices = @transform_0, window_bounds = array<i64: 8, 8, 16>}, {pipeline_mode = #tpu.pipeline_mode<synchronous>, transform_indices = @transform_1, window_bounds = array<i64: 16, 32>}, {pipeline_mode = #tpu.pipeline_mode<synchronous>, transform_indices = @transform_2, window_bounds = array<i64: 32, 32>}, {pipeline_mode = #tpu.pipeline_mode<synchronous>, transform_indices = @transform_3, window_bounds = array<i64: 1, 32>}, {pipeline_mode = #tpu.pipeline_mode<synchronous>, transform_indices = @transform_4, window_bounds = array<i64: 32, 128>}, {pipeline_mode = #tpu.pipeline_mode<synchronous>, transform_indices = @transform_5, window_bounds = array<i64: 1, 128>}, {transform_indices = @transform_6, window_bounds = array<i64: 8, 128>}]} {
    %c0 = arith.constant 0 : index
    %c0_0 = arith.constant 0 : index
    %c0_1 = arith.constant 0 : index
    %0 = vector.load %arg1[%c0, %c0_0, %c0_1] : memref<8x8x16xbf16, #tpu.memory_space<vmem>>, vector<8x8x16xbf16>
    %1 = vector.shape_cast %0 : vector<8x8x16xbf16> to vector<64x16xbf16>
    %c0_2 = arith.constant 0 : index
    %c0_3 = arith.constant 0 : index
    %2 = vector.load %arg2[%c0_2, %c0_3] : memref<16x32xbf16, #tpu.memory_space<vmem>>, vector<16x32xbf16>
    %cst = arith.constant dense<0.000000e+00> : vector<64x32xf32>
    %3 = tpu.matmul %1, %2, %cst {dimension_numbers = #tpu.dot_dimension_numbers<[1], [0], [0], [1], [0, 0, 1, 1], [], []>} : vector<64x16xbf16>, vector<16x32xbf16>, vector<64x32xf32> -> vector<64x32xf32>
    %c0_4 = arith.constant 0 : index
    %c0_5 = arith.constant 0 : index
    %4 = vector.load %arg4[%c0_4, %c0_5] : memref<1x32xf32, #tpu.memory_space<vmem>>, vector<1x32xf32>
    %5 = vector.broadcast %4 : vector<1x32xf32> to vector<64x32xf32>
    %6 = arith.addf %3, %5 : vector<64x32xf32>
    %c0_6 = arith.constant 0 : index
    %c0_7 = arith.constant 0 : index
    %7 = vector.load %arg8[%c0_6, %c0_7] : memref<64x32xf32, #tpu.memory_space<vmem>>, vector<64x32xf32>
    tpu.vector_store %arg8[%c0_6, %c0_7], %6 {strides = array<i32>} : memref<64x32xf32, #tpu.memory_space<vmem>>, vector<64x32xf32>,
    %c0_8 = arith.constant 0 : index
    %c0_9 = arith.constant 0 : index
    %8 = vector.load %arg3[%c0_8, %c0_9] : memref<32x32xbf16, #tpu.memory_space<vmem>>, vector<32x32xbf16>
    %cst_10 = arith.constant 0.000000e+00 : f32
    %9 = vector.broadcast %cst_10 : f32 to vector<8x32xf32>
    %c0_i32 = arith.constant 0 : i32
    %c8_i32 = arith.constant 8 : i32
    %10 = arith.muli %c0_i32, %c8_i32 : i32
    %11 = tpu.assume_multiple %10, 8 : i32
    %12 = arith.index_cast %11 : i32 to index
    %c0_11 = arith.constant 0 : index
    %13 = vector.load %arg8[%12, %c0_11] : memref<64x32xf32, #tpu.memory_space<vmem>>, vector<8x32xf32>
    %14 = arith.truncf %9 : vector<8x32xf32> to vector<8x32xbf16>
    %cst_12 = arith.constant dense<0.000000e+00> : vector<8x32xf32>
    %15 = tpu.matmul %14, %8, %cst_12 {dimension_numbers = #tpu.dot_dimension_numbers<[1], [0], [0], [1], [0, 0, 1, 1], [], []>} : vector<8x32xbf16>, vector<32x32xbf16>, vector<8x32xf32> -> vector<8x32xf32>
    %16 = arith.addf %13, %15 : vector<8x32xf32>
    %17 = math.tanh %16 : vector<8x32xf32>
    %c1_i32 = arith.constant 1 : i32
    %c8_i32_13 = arith.constant 8 : i32
    %18 = arith.muli %c1_i32, %c8_i32_13 : i32
    %19 = tpu.assume_multiple %18, 8 : i32
    %20 = arith.index_cast %19 : i32 to index
    %c0_14 = arith.constant 0 : index
    %21 = vector.load %arg8[%20, %c0_14] : memref<64x32xf32, #tpu.memory_space<vmem>>, vector<8x32xf32>
    %22 = arith.truncf %17 : vector<8x32xf32> to vector<8x32xbf16>
    %cst_15 = arith.constant dense<0.000000e+00> : vector<8x32xf32>
    %23 = tpu.matmul %22, %8, %cst_15 {dimension_numbers = #tpu.dot_dimension_numbers<[1], [0], [0], [1], [0, 0, 1, 1], [], []>} : vector<8x32xbf16>, vector<32x32xbf16>, vector<8x32xf32> -> vector<8x32xf32>
    %24 = arith.addf %21, %23 : vector<8x32xf32>
    %25 = math.tanh %24 : vector<8x32xf32>
    %c2_i32 = arith.constant 2 : i32
    %c8_i32_16 = arith.constant 8 : i32
    %26 = arith.muli %c2_i32, %c8_i32_16 : i32
    %27 = tpu.assume_multiple %26, 8 : i32
    %28 = arith.index_cast %27 : i32 to index
    %c0_17 = arith.constant 0 : index
    %29 = vector.load %arg8[%28, %c0_17] : memref<64x32xf32, #tpu.memory_space<vmem>>, vector<8x32xf32>
    %30 = arith.truncf %25 : vector<8x32xf32> to vector<8x32xbf16>
    %cst_18 = arith.constant dense<0.000000e+00> : vector<8x32xf32>
    %31 = tpu.matmul %30, %8, %cst_18 {dimension_numbers = #tpu.dot_dimension_numbers<[1], [0], [0], [1], [0, 0, 1, 1], [], []>} : vector<8x32xbf16>, vector<32x32xbf16>, vector<8x32xf32> -> vector<8x32xf32>
    %32 = arith.addf %29, %31 : vector<8x32xf32>
    %33 = math.tanh %32 : vector<8x32xf32>
    %c3_i32 = arith.constant 3 : i32
    %c8_i32_19 = arith.constant 8 : i32
    %34 = arith.muli %c3_i32, %c8_i32_19 : i32
    %35 = tpu.assume_multiple %34, 8 : i32
    %36 = arith.index_cast %35 : i32 to index
    %c0_20 = arith.constant 0 : index
    %37 = vector.load %arg8[%36, %c0_20] : memref<64x32xf32, #tpu.memory_space<vmem>>, vector<8x32xf32>
    %38 = arith.truncf %33 : vector<8x32xf32> to vector<8x32xbf16>
    %cst_21 = arith.constant dense<0.000000e+00> : vector<8x32xf32>
    %39 = tpu.matmul %38, %8, %cst_21 {dimension_numbers = #tpu.dot_dimension_numbers<[1], [0], [0], [1], [0, 0, 1, 1], [], []>} : vector<8x32xbf16>, vector<32x32xbf16>, vector<8x32xf32> -> vector<8x32xf32>
    %40 = arith.addf %37, %39 : vector<8x32xf32>
    %41 = math.tanh %40 : vector<8x32xf32>
    %c4_i32 = arith.constant 4 : i32
    %c8_i32_22 = arith.constant 8 : i32
    %42 = arith.muli %c4_i32, %c8_i32_22 : i32
    %43 = tpu.assume_multiple %42, 8 : i32
    %44 = arith.index_cast %43 : i32 to index
    %c0_23 = arith.constant 0 : index
    %45 = vector.load %arg8[%44, %c0_23] : memref<64x32xf32, #tpu.memory_space<vmem>>, vector<8x32xf32>
    %46 = arith.truncf %41 : vector<8x32xf32> to vector<8x32xbf16>
    %cst_24 = arith.constant dense<0.000000e+00> : vector<8x32xf32>
    %47 = tpu.matmul %46, %8, %cst_24 {dimension_numbers = #tpu.dot_dimension_numbers<[1], [0], [0], [1], [0, 0, 1, 1], [], []>} : vector<8x32xbf16>, vector<32x32xbf16>, vector<8x32xf32> -> vector<8x32xf32>
    %48 = arith.addf %45, %47 : vector<8x32xf32>
    %49 = math.tanh %48 : vector<8x32xf32>
    %c5_i32 = arith.constant 5 : i32
    %c8_i32_25 = arith.constant 8 : i32
    %50 = arith.muli %c5_i32, %c8_i32_25 : i32
    %51 = tpu.assume_multiple %50, 8 : i32
    %52 = arith.index_cast %51 : i32 to index
    %c0_26 = arith.constant 0 : index
    %53 = vector.load %arg8[%52, %c0_26] : memref<64x32xf32, #tpu.memory_space<vmem>>, vector<8x32xf32>
    %54 = arith.truncf %49 : vector<8x32xf32> to vector<8x32xbf16>
    %cst_27 = arith.constant dense<0.000000e+00> : vector<8x32xf32>
    %55 = tpu.matmul %54, %8, %cst_27 {dimension_numbers = #tpu.dot_dimension_numbers<[1], [0], [0], [1], [0, 0, 1, 1], [], []>} : vector<8x32xbf16>, vector<32x32xbf16>, vector<8x32xf32> -> vector<8x32xf32>
    %56 = arith.addf %53, %55 : vector<8x32xf32>
    %57 = math.tanh %56 : vector<8x32xf32>
    %c6_i32 = arith.constant 6 : i32
    %c8_i32_28 = arith.constant 8 : i32
    %58 = arith.muli %c6_i32, %c8_i32_28 : i32
    %59 = tpu.assume_multiple %58, 8 : i32
    %60 = arith.index_cast %59 : i32 to index
    %c0_29 = arith.constant 0 : index
    %61 = vector.load %arg8[%60, %c0_29] : memref<64x32xf32, #tpu.memory_space<vmem>>, vector<8x32xf32>
    %62 = arith.truncf %57 : vector<8x32xf32> to vector<8x32xbf16>
    %cst_30 = arith.constant dense<0.000000e+00> : vector<8x32xf32>
    %63 = tpu.matmul %62, %8, %cst_30 {dimension_numbers = #tpu.dot_dimension_numbers<[1], [0], [0], [1], [0, 0, 1, 1], [], []>} : vector<8x32xbf16>, vector<32x32xbf16>, vector<8x32xf32> -> vector<8x32xf32>
    %64 = arith.addf %61, %63 : vector<8x32xf32>
    %65 = math.tanh %64 : vector<8x32xf32>
    %c7_i32 = arith.constant 7 : i32
    %c8_i32_31 = arith.constant 8 : i32
    %66 = arith.muli %c7_i32, %c8_i32_31 : i32
    %67 = tpu.assume_multiple %66, 8 : i32
    %68 = arith.index_cast %67 : i32 to index
    %c0_32 = arith.constant 0 : index
    %69 = vector.load %arg8[%68, %c0_32] : memref<64x32xf32, #tpu.memory_space<vmem>>, vector<8x32xf32>
    %70 = arith.truncf %65 : vector<8x32xf32> to vector<8x32xbf16>
    %cst_33 = arith.constant dense<0.000000e+00> : vector<8x32xf32>
    %71 = tpu.matmul %70, %8, %cst_33 {dimension_numbers = #tpu.dot_dimension_numbers<[1], [0], [0], [1], [0, 0, 1, 1], [], []>} : vector<8x32xbf16>, vector<32x32xbf16>, vector<8x32xf32> -> vector<8x32xf32>
    %72 = arith.addf %69, %71 : vector<8x32xf32>
    %73 = math.tanh %72 : vector<8x32xf32>
    %c8_i32_34 = arith.constant 8 : i32
    %74 = arith.truncf %73 : vector<8x32xf32> to vector<8x32xbf16>
    %c0_35 = arith.constant 0 : index
    %c0_36 = arith.constant 0 : index
    %75 = vector.load %arg5[%c0_35, %c0_36] : memref<32x128xbf16, #tpu.memory_space<vmem>>, vector<32x128xbf16>
    %cst_37 = arith.constant dense<0.000000e+00> : vector<8x128xf32>
    %76 = tpu.matmul %74, %75, %cst_37 {dimension_numbers = #tpu.dot_dimension_numbers<[1], [0], [0], [1], [0, 0, 1, 1], [], []>} : vector<8x32xbf16>, vector<32x128xbf16>, vector<8x128xf32> -> vector<8x128xf32>
    %c0_38 = arith.constant 0 : index
    %c0_39 = arith.constant 0 : index
    %77 = vector.load %arg6[%c0_38, %c0_39] : memref<1x128xf32, #tpu.memory_space<vmem>>, vector<1x128xf32>
    %78 = vector.broadcast %77 : vector<1x128xf32> to vector<8x128xf32>
    %79 = arith.addf %76, %78 : vector<8x128xf32>
    %c0_40 = arith.constant 0 : index
    %c0_41 = arith.constant 0 : index
    %80 = vector.load %arg7[%c0_40, %c0_41] : memref<8x128xf32, #tpu.memory_space<vmem>>, vector<8x128xf32>
    tpu.vector_store %arg7[%c0_40, %c0_41], %79 {strides = array<i32>} : memref<8x128xf32, #tpu.memory_space<vmem>>, vector<8x128xf32>,
    return
  }
  func.func @transform_0(%arg0: i32) -> (i32, i32, i32) {
    %c0_i32 = arith.constant 0 : i32
    %c0_i32_0 = arith.constant 0 : i32
    %c0_i32_1 = arith.constant 0 : i32
    return %c0_i32, %arg0, %c0_i32_0 : i32, i32, i32
  }
  func.func @transform_1(%arg0: i32) -> (i32, i32) {
    %c0_i32 = arith.constant 0 : i32
    %c0_i32_0 = arith.constant 0 : i32
    %c0_i32_1 = arith.constant 0 : i32
    return %c0_i32, %c0_i32_0 : i32, i32
  }
  func.func @transform_2(%arg0: i32) -> (i32, i32) {
    %c0_i32 = arith.constant 0 : i32
    %c0_i32_0 = arith.constant 0 : i32
    %c0_i32_1 = arith.constant 0 : i32
    return %c0_i32, %c0_i32_0 : i32, i32
  }
  func.func @transform_3(%arg0: i32) -> (i32, i32) {
    %c0_i32 = arith.constant 0 : i32
    %c0_i32_0 = arith.constant 0 : i32
    %c0_i32_1 = arith.constant 0 : i32
    return %c0_i32, %c0_i32_0 : i32, i32
  }
  func.func @transform_4(%arg0: i32) -> (i32, i32) {
    %c0_i32 = arith.constant 0 : i32
    %c0_i32_0 = arith.constant 0 : i32
    %c0_i32_1 = arith.constant 0 : i32
    return %c0_i32, %c0_i32_0 : i32, i32
  }
  func.func @transform_5(%arg0: i32) -> (i32, i32) {
    %c0_i32 = arith.constant 0 : i32
    %c0_i32_0 = arith.constant 0 : i32
    %c0_i32_1 = arith.constant 0 : i32
    return %c0_i32, %c0_i32_0 : i32, i32
  }
  func.func @transform_6(%arg0: i32) -> (i32, i32) {
    %c0_i32 = arith.constant 0 : i32
    %c0_i32_0 = arith.constant 0 : i32
    return %arg0, %c0_i32 : i32, i32
  }
}

</mosaic_0001>

<llo_original>
// kernel: tpu_custom_call.1
$region0: #{tpu_custom_call.1}
  #allocation0 [shape = 'u32[]', space=smem, size = 0x4, offset = 0x4, fixed_abs, tag = 'smem constant byte address 0x4 - core index']
  #allocation1 [shape = 'u32[144,128]{1,0:T(1,128)}', space=vmem, size = 0x12000, scoped, tag = 'internal scratch']
  #allocation2 [shape = 'f32[64,32]{1,0:T(8,128)}', space=vmem, size = 0x8000, scoped, tag = 'scratch operand']
  %s0 = inlined_call_operand.hbm [shape: bf16[8,8,16], index: 0, kind: input, shape index: {}]
  %s1 = inlined_call_operand.hbm [shape: bf16[16,32], index: 1, kind: input, shape index: {}]
  %s2 = inlined_call_operand.hbm [shape: bf16[32,32], index: 2, kind: input, shape index: {}]
  %s3 = inlined_call_operand.vmem [shape: f32[1,32], index: 3, kind: input, shape index: {}]
  %s4 = inlined_call_operand.hbm [shape: bf16[32,128], index: 4, kind: input, shape index: {}]
  %s5 = inlined_call_operand.vmem [shape: f32[1,128], index: 5, kind: input, shape index: {}]
  %s6 = inlined_call_operand.hbm [shape: f32[8,128], index: 6, kind: output, shape index: {}]
  %s7 = sld [smem:[#allocation0]]
  $region50: #{tpu_custom_call.1} parent=0
    _
  %s9 = ssub.s32 1, %s7
  %s10 = scalar_select 0, %s9, %s7
  $region1: #{tpu_custom_call.1} parent=0
    #allocation3 [shape = 'u8[16384]{0}', space=vmem, size = 0x4000, scoped, tag = 'input window, operand 0, single buffered']
    #allocation4 [shape = 's32[1]{0}', space=sflag, size = 0x4, scoped, tag = 'scoped memory for tpu_custom_call.1']
    #allocation5 [shape = 's32[1]{0}', space=sflag, size = 0x4, scoped, tag = 'scoped memory for tpu_custom_call.1']
    #allocation6 [shape = 'u8[4096]{0}', space=vmem, size = 0x1000, scoped, tag = 'input window, operand 1, single buffered']
    #allocation7 [shape = 's32[1]{0}', space=sflag, size = 0x4, scoped, tag = 'scoped memory for tpu_custom_call.1']
    #allocation8 [shape = 'u8[8192]{0}', space=vmem, size = 0x2000, scoped, tag = 'input window, operand 2, single buffered']
    #allocation9 [shape = 'u8[8192]{0}', space=vmem, size = 0x2000, scoped, tag = 'input window, operand 4, single buffered']
    #allocation10 [shape = 's32[1]{0}', space=sflag, size = 0x4, scoped, tag = 'scoped memory for tpu_custom_call.1']
    #allocation11 [shape = 'u8[4096]{0}', space=vmem, size = 0x1000, scoped, tag = 'output window, operand 0, single buffered']
    %11 = vsyncpa [#allocation4], 0
    %12 = vsyncpa [#allocation7], 0
    %13 = vsyncpa [#allocation10], 0
    %14 = vsyncpa [#allocation5], 0
    // Predicated region
    $region2: #{tpu_custom_call.1} parent=1 // pred_check
      _
    $region3: #{tpu_custom_call.1} parent=1 // pred_check_branch
      %16 = sbr.rel (0) target = $region5
    $region4: #{tpu_custom_call.1} parent=1 // pred_region
      %s18 = ssub.s32 512, 512
      %19 = vsyncadd [#allocation4], %s18
      %s20 = sshll.u32 [#allocation3], 4
      %s21 = int_to_ptr.vmem [resolvable:$true] %s20
      %26 = dma.hbm_to_vmem [thread:$0]  %s0, 512, %s21, [#allocation4], 64, 64, 4
    $region5: #{tpu_custom_call.1} parent=1 // pred_fallthru
      _
    // Predicated region
    $region6: #{tpu_custom_call.1} parent=1 // pred_check
      _
    $region7: #{tpu_custom_call.1} parent=1 // pred_check_branch
      %28 = sbr.rel (0) target = $region9
    $region8: #{tpu_custom_call.1} parent=1 // pred_region
      %s30 = ssub.s32 128, 128
      %31 = vsyncadd [#allocation7], %s30
      %s32 = sshll.u32 [#allocation6], 4
      %s33 = int_to_ptr.vmem [resolvable:$true] %s32
      %38 = dma.hbm_to_vmem [thread:$0]  %s1, 128, %s33, [#allocation7], 64, 64, 4
    $region9: #{tpu_custom_call.1} parent=1 // pred_fallthru
      _
    // Predicated region
    $region10: #{tpu_custom_call.1} parent=1 // pred_check
      _
    $region11: #{tpu_custom_call.1} parent=1 // pred_check_branch
      %40 = sbr.rel (0) target = $region13
    $region12: #{tpu_custom_call.1} parent=1 // pred_region
      %s42 = ssub.s32 256, 256
      %43 = vsyncadd [#allocation7], %s42
      %s44 = sshll.u32 [#allocation8], 4
      %s45 = int_to_ptr.vmem [resolvable:$true] %s44
      %50 = dma.hbm_to_vmem [thread:$0]  %s2, 256, %s45, [#allocation7], 64, 64, 4
    $region13: #{tpu_custom_call.1} parent=1 // pred_fallthru
      _
    // Predicated region
    $region14: #{tpu_custom_call.1} parent=1 // pred_check
      _
    $region15: #{tpu_custom_call.1} parent=1 // pred_check_branch
      %52 = sbr.rel (0) target = $region17
    $region16: #{tpu_custom_call.1} parent=1 // pred_region
      _
    $region17: #{tpu_custom_call.1} parent=1 // pred_fallthru
      _
    // Predicated region
    $region18: #{tpu_custom_call.1} parent=1 // pred_check
      _
    $region19: #{tpu_custom_call.1} parent=1 // pred_check_branch
      %54 = sbr.rel (0) target = $region21
    $region20: #{tpu_custom_call.1} parent=1 // pred_region
      %s56 = ssub.s32 256, 256
      %57 = vsyncadd [#allocation10], %s56
      %s58 = sshll.u32 [#allocation9], 4
      %s59 = int_to_ptr.vmem [resolvable:$true] %s58
      %64 = dma.hbm_to_vmem [thread:$0]  %s4, 256, %s59, [#allocation10], 64, 64, 4
    $region21: #{tpu_custom_call.1} parent=1 // pred_fallthru
      _
    // Predicated region
    $region22: #{tpu_custom_call.1} parent=1 // pred_check
      _
    $region23: #{tpu_custom_call.1} parent=1 // pred_check_branch
      %66 = sbr.rel (0) target = $region25
    $region24: #{tpu_custom_call.1} parent=1 // pred_region
      _
    $region25: #{tpu_custom_call.1} parent=1 // pred_fallthru
      _
    // Predicated region
    $region26: #{tpu_custom_call.1} parent=1 // pred_check
      _
    $region27: #{tpu_custom_call.1} parent=1 // pred_check_branch
      %68 = sbr.rel (0) target = $region29
    $region28: #{tpu_custom_call.1} parent=1 // pred_region
      %69 = dma.done [#allocation4], 512
    $region29: #{tpu_custom_call.1} parent=1 // pred_fallthru
      _
    // Predicated region
    $region30: #{tpu_custom_call.1} parent=1 // pred_check
      _
    $region31: #{tpu_custom_call.1} parent=1 // pred_check_branch
      %71 = sbr.rel (0) target = $region33
    $region32: #{tpu_custom_call.1} parent=1 // pred_region
      %72 = dma.done [#allocation7], 128
    $region33: #{tpu_custom_call.1} parent=1 // pred_fallthru
      _
    // Predicated region
    $region34: #{tpu_custom_call.1} parent=1 // pred_check
      _
    $region35: #{tpu_custom_call.1} parent=1 // pred_check_branch
      %74 = sbr.rel (0) target = $region37
    $region36: #{tpu_custom_call.1} parent=1 // pred_region
      %75 = dma.done [#allocation7], 256
    $region37: #{tpu_custom_call.1} parent=1 // pred_fallthru
      _
    // Predicated region
    $region38: #{tpu_custom_call.1} parent=1 // pred_check
      _
    $region39: #{tpu_custom_call.1} parent=1 // pred_check_branch
      %77 = sbr.rel (0) target = $region41
    $region40: #{tpu_custom_call.1} parent=1 // pred_region
      %78 = dma.done [#allocation10], 256
    $region41: #{tpu_custom_call.1} parent=1 // pred_fallthru
      _
    %v80 = vld [vmem:[#allocation3] sm:$0xf]
    %v81 = vld [vmem:[#allocation3 + $0x4] sm:$0xf]
    %v82 = vld [vmem:[#allocation3 + $0x8] sm:$0xf]
    %v83 = vld [vmem:[#allocation3 + $0xc] sm:$0xf]
    %v84 = vld [vmem:[#allocation3 + $0x10] sm:$0xf]
    %v85 = vld [vmem:[#allocation3 + $0x14] sm:$0xf]
    %v86 = vld [vmem:[#allocation3 + $0x18] sm:$0xf]
    %v87 = vld [vmem:[#allocation3 + $0x1c] sm:$0xf]
    %v88 = vld [vmem:[#allocation6] sm:$0xf]
    %v89 = vld [vmem:[#allocation6 + $0x4] sm:$0xf]
    %v90 = vld [vmem:[%s3] sm:$0x1]
    %v92 = vlaneseq
    %v93 = vshrl.u32 %v92, 7
    %v94 = vsub.s32 0, %v93
    %v95 = vrot.slane %v90, %v94
    %v105 = vunpack.c.l.b16 %v80
    %v106 = vunpack.c.l.b16 %v81
    %v107 = vunpack.c.l.b16 %v82
    %v108 = vunpack.c.l.b16 %v83
    %v109 = vunpack.c.l.b16 %v84
    %v110 = vunpack.c.l.b16 %v85
    %v111 = vunpack.c.l.b16 %v86
    %v112 = vunpack.c.l.b16 %v87
    %v113 = vpack.c.b16 %v106, %v105
    %v114 = vpack.c.b16 %v108, %v107
    %v115 = vpack.c.b16 %v110, %v109
    %v116 = vpack.c.b16 %v112, %v111
    %v119 = vunpack.c.l.b16 %v88
    %v120 = vunpack.c.l.b16 %v89
    %v121 = vpack.c.b16 %v120, %v119
    %vm123 = vcmask 130048
    %v125 = vsel %vm123, %v113, 0
    %v128 = vsel %vm123, %v114, 0
    %v131 = vsel %vm123, %v115, 0
    %v134 = vsel %vm123, %v116, 0
    %136 = vmatprep.subr.bf16.mxu0 0
    %137 = vmatpush1.bf16.msra.mxu0 %v121
    %138 = vmatprep.subr.bf16.mxu0 0
    %139 = vmatpush1.bf16.msra.mxu0 0
    %140 = vmatprep.subr.bf16.mxu0 0
    %141 = vmatpush1.bf16.msra.mxu0 0
    %142 = vmatprep.subr.bf16.mxu0 0
    %143 = vmatpush1.bf16.msra.mxu0 0
    %144 = vmatprep.subr.bf16.mxu0 0
    %145 = vmatpush1.bf16.msra.mxu0 0
    %146 = vmatprep.subr.bf16.mxu0 0
    %147 = vmatpush1.bf16.msra.mxu0 0
    %148 = vmatprep.subr.bf16.mxu0 0
    %149 = vmatpush1.bf16.msra.mxu0 0
    %150 = vmatprep.subr.bf16.mxu0 0
    %151 = vmatpush1.bf16.msra.mxu0 0
    %152 = vmatprep.subr.bf16.mxu0 0
    %153 = vmatpush1.bf16.msra.mxu0 0
    %154 = vmatprep.subr.bf16.mxu0 0
    %155 = vmatpush1.bf16.msra.mxu0 0
    %156 = vmatprep.subr.bf16.mxu0 0
    %157 = vmatpush1.bf16.msra.mxu0 0
    %158 = vmatprep.subr.bf16.mxu0 0
    %159 = vmatpush1.bf16.msra.mxu0 0
    %160 = vmatprep.subr.bf16.mxu0 0
    %161 = vmatpush1.bf16.msra.mxu0 0
    %162 = vmatprep.subr.bf16.mxu0 0
    %163 = vmatpush1.bf16.msra.mxu0 0
    %164 = vmatprep.subr.bf16.mxu0 0
    %165 = vmatpush1.bf16.msra.mxu0 0
    %166 = vmatprep.subr.bf16.mxu0 0
    %167 = vmatpush1.bf16.msra.mxu0 0
    %168 = vmatprep.mubr.bf16.mxu0 0
    %169 = vmatmul.mubr.bf16.gmra.mrb[0].mxu0 %v125
    %v170 = vpop.f32.mrb[0].mxu0
    %v171 = vadd.f32 %v95, %v170
    %v172 = vpop.f32.mrb[0].mxu0
    %v173 = vpop.f32.mrb[0].mxu0
    %v174 = vadd.f32 %v95, %v173
    %v175 = vpop.f32.mrb[0].mxu0
    %176 = vmatprep.mubr.bf16.mxu0 0
    %177 = vmatmul.mubr.bf16.gmra.mrb[0].mxu0 %v128
    %v178 = vpop.f32.mrb[0].mxu0
    %v179 = vadd.f32 %v95, %v178
    %v180 = vpop.f32.mrb[0].mxu0
    %v181 = vpop.f32.mrb[0].mxu0
    %v182 = vadd.f32 %v95, %v181
    %v183 = vpop.f32.mrb[0].mxu0
    %184 = vmatprep.mubr.bf16.mxu0 0
    %185 = vmatmul.mubr.bf16.gmra.mrb[0].mxu0 %v131
    %v186 = vpop.f32.mrb[0].mxu0
    %v187 = vadd.f32 %v95, %v186
    %v188 = vpop.f32.mrb[0].mxu0
    %v189 = vpop.f32.mrb[0].mxu0
    %v190 = vadd.f32 %v95, %v189
    %v191 = vpop.f32.mrb[0].mxu0
    %192 = vmatprep.mubr.bf16.mxu0 0
    %193 = vmatmul.mubr.bf16.gmra.mrb[0].mxu0 %v134
    %v194 = vpop.f32.mrb[0].mxu0
    %v195 = vadd.f32 %v95, %v194
    %v196 = vpop.f32.mrb[0].mxu0
    %v197 = vpop.f32.mrb[0].mxu0
    %v198 = vadd.f32 %v95, %v197
    %v199 = vpop.f32.mrb[0].mxu0
    %200 = vdwg.mxu0
    %vm201 = vcmask 261120
    %202 = vst.msk [vmem:[#allocation2] sm:$0xff] %vm201, %v171
    %203 = vst.msk [vmem:[#allocation2 + $0x8] sm:$0xff] %vm201, %v174
    %204 = vst.msk [vmem:[#allocation2 + $0x10] sm:$0xff] %vm201, %v179
    %205 = vst.msk [vmem:[#allocation2 + $0x18] sm:$0xff] %vm201, %v182
    %206 = vst.msk [vmem:[#allocation2 + $0x20] sm:$0xff] %vm201, %v187
    %207 = vst.msk [vmem:[#allocation2 + $0x28] sm:$0xff] %vm201, %v190
    %208 = vst.msk [vmem:[#allocation2 + $0x30] sm:$0xff] %vm201, %v195
    %209 = vst.msk [vmem:[#allocation2 + $0x38] sm:$0xff] %vm201, %v198
    %v210 = vld [vmem:[#allocation8] sm:$0xf]
    %v211 = vld [vmem:[#allocation8 + $0x4] sm:$0xf]
    %v212 = vld [vmem:[#allocation8 + $0x8] sm:$0xf]
    %v213 = vld [vmem:[#allocation8 + $0xc] sm:$0xf]
    %v214 = vld [vmem:[#allocation2] sm:$0xff]
    %v219 = vunpack.c.l.b16 %v210
    %v220 = vunpack.c.l.b16 %v211
    %v221 = vunpack.c.l.b16 %v212
    %v222 = vunpack.c.l.b16 %v213
    %v223 = vpack.c.b16 %v220, %v219
    %v224 = vpack.c.b16 %v222, %v221
    %v228 = vsel %vm201, 0, 0
    %230 = vmatprep.subr.bf16.mxu0 0
    %231 = vmatpush1.bf16.msra.mxu0 %v223
    %232 = vmatprep.subr.bf16.mxu0 0
    %233 = vmatpush1.bf16.msra.mxu0 %v224
    %234 = vmatprep.subr.bf16.mxu0 0
    %235 = vmatpush1.bf16.msra.mxu0 0
    %236 = vmatprep.subr.bf16.mxu0 0
    %237 = vmatpush1.bf16.msra.mxu0 0
    %238 = vmatprep.subr.bf16.mxu0 0
    %239 = vmatpush1.bf16.msra.mxu0 0
    %240 = vmatprep.subr.bf16.mxu0 0
    %241 = vmatpush1.bf16.msra.mxu0 0
    %242 = vmatprep.subr.bf16.mxu0 0
    %243 = vmatpush1.bf16.msra.mxu0 0
    %244 = vmatprep.subr.bf16.mxu0 0
    %245 = vmatpush1.bf16.msra.mxu0 0
    %246 = vmatprep.subr.bf16.mxu0 0
    %247 = vmatpush1.bf16.msra.mxu0 0
    %248 = vmatprep.subr.bf16.mxu0 0
    %249 = vmatpush1.bf16.msra.mxu0 0
    %250 = vmatprep.subr.bf16.mxu0 0
    %251 = vmatpush1.bf16.msra.mxu0 0
    %252 = vmatprep.subr.bf16.mxu0 0
    %253 = vmatpush1.bf16.msra.mxu0 0
    %254 = vmatprep.subr.bf16.mxu0 0
    %255 = vmatpush1.bf16.msra.mxu0 0
    %256 = vmatprep.subr.bf16.mxu0 0
    %257 = vmatpush1.bf16.msra.mxu0 0
    %258 = vmatprep.subr.bf16.mxu0 0
    %259 = vmatpush1.bf16.msra.mxu0 0
    %260 = vmatprep.subr.bf16.mxu0 0
    %261 = vmatpush1.bf16.msra.mxu0 0
    %262 = vmatprep.mubr.bf16.mxu0 0
    %263 = vmatmul.mubr.bf16.gmra.mrb[0].mxu0 %v228
    %v264 = vpop.f32.mrb[0].mxu0
    %v265 = vadd.f32 0.0, %v264
    %v266 = vpop.f32.mrb[0].mxu0
    %v267 = vpop.f32.mrb[0].mxu0
    %v268 = vpop.f32.mrb[0].mxu0
    %269 = vdwg.mxu0
    %v270 = vadd.f32 %v214, %v265
    %v271 = vtanh.pop %v270
    %s272 = scalar_lea.vmem [#allocation2], 8
    %v273 = vld [vmem:[%s272] sm:$0xff]
    %v274 = vpack.c.bf16 %v271, %v271
    %v276 = vsel %vm201, %v274, 0
    %278 = vmatprep.subr.bf16.mxu0 0
    %279 = vmatpush1.bf16.msra.mxu0 %v223
    %280 = vmatprep.subr.bf16.mxu0 0
    %281 = vmatpush1.bf16.msra.mxu0 %v224
    %282 = vmatprep.subr.bf16.mxu0 0
    %283 = vmatpush1.bf16.msra.mxu0 0
    %284 = vmatprep.subr.bf16.mxu0 0
    %285 = vmatpush1.bf16.msra.mxu0 0
    %286 = vmatprep.subr.bf16.mxu0 0
    %287 = vmatpush1.bf16.msra.mxu0 0
    %288 = vmatprep.subr.bf16.mxu0 0
    %289 = vmatpush1.bf16.msra.mxu0 0
    %290 = vmatprep.subr.bf16.mxu0 0
    %291 = vmatpush1.bf16.msra.mxu0 0
    %292 = vmatprep.subr.bf16.mxu0 0
    %293 = vmatpush1.bf16.msra.mxu0 0
    %294 = vmatprep.subr.bf16.mxu0 0
    %295 = vmatpush1.bf16.msra.mxu0 0
    %296 = vmatprep.subr.bf16.mxu0 0
    %297 = vmatpush1.bf16.msra.mxu0 0
    %298 = vmatprep.subr.bf16.mxu0 0
    %299 = vmatpush1.bf16.msra.mxu0 0
    %300 = vmatprep.subr.bf16.mxu0 0
    %301 = vmatpush1.bf16.msra.mxu0 0
    %302 = vmatprep.subr.bf16.mxu0 0
    %303 = vmatpush1.bf16.msra.mxu0 0
    %304 = vmatprep.subr.bf16.mxu0 0
    %305 = vmatpush1.bf16.msra.mxu0 0
    %306 = vmatprep.subr.bf16.mxu0 0
    %307 = vmatpush1.bf16.msra.mxu0 0
    %308 = vmatprep.subr.bf16.mxu0 0
    %309 = vmatpush1.bf16.msra.mxu0 0
    %310 = vmatprep.mubr.bf16.mxu0 0
    %311 = vmatmul.mubr.bf16.gmra.mrb[0].mxu0 %v276
    %v312 = vpop.f32.mrb[0].mxu0
    %v313 = vadd.f32 0.0, %v312
    %v314 = vpop.f32.mrb[0].mxu0
    %v315 = vpop.f32.mrb[0].mxu0
    %v316 = vpop.f32.mrb[0].mxu0
    %317 = vdwg.mxu0
    %v318 = vadd.f32 %v273, %v313
    %v319 = vtanh.pop %v318
    %s320 = scalar_lea.vmem [#allocation2], 16
    %v321 = vld [vmem:[%s320] sm:$0xff]
    %v322 = vpack.c.bf16 %v319, %v319
    %v324 = vsel %vm201, %v322, 0
    %326 = vmatprep.subr.bf16.mxu0 0
    %327 = vmatpush1.bf16.msra.mxu0 %v223
    %328 = vmatprep.subr.bf16.mxu0 0
    %329 = vmatpush1.bf16.msra.mxu0 %v224
    %330 = vmatprep.subr.bf16.mxu0 0
    %331 = vmatpush1.bf16.msra.mxu0 0
    %332 = vmatprep.subr.bf16.mxu0 0
    %333 = vmatpush1.bf16.msra.mxu0 0
    %334 = vmatprep.subr.bf16.mxu0 0
    %335 = vmatpush1.bf16.msra.mxu0 0
    %336 = vmatprep.subr.bf16.mxu0 0
    %337 = vmatpush1.bf16.msra.mxu0 0
    %338 = vmatprep.subr.bf16.mxu0 0
    %339 = vmatpush1.bf16.msra.mxu0 0
    %340 = vmatprep.subr.bf16.mxu0 0
    %341 = vmatpush1.bf16.msra.mxu0 0
    %342 = vmatprep.subr.bf16.mxu0 0
    %343 = vmatpush1.bf16.msra.mxu0 0
    %344 = vmatprep.subr.bf16.mxu0 0
    %345 = vmatpush1.bf16.msra.mxu0 0
    %346 = vmatprep.subr.bf16.mxu0 0
    %347 = vmatpush1.bf16.msra.mxu0 0
    %348 = vmatprep.subr.bf16.mxu0 0
    %349 = vmatpush1.bf16.msra.mxu0 0
    %350 = vmatprep.subr.bf16.mxu0 0
    %351 = vmatpush1.bf16.msra.mxu0 0
    %352 = vmatprep.subr.bf16.mxu0 0
    %353 = vmatpush1.bf16.msra.mxu0 0
    %354 = vmatprep.subr.bf16.mxu0 0
    %355 = vmatpush1.bf16.msra.mxu0 0
    %356 = vmatprep.subr.bf16.mxu0 0
    %357 = vmatpush1.bf16.msra.mxu0 0
    %358 = vmatprep.mubr.bf16.mxu0 0
    %359 = vmatmul.mubr.bf16.gmra.mrb[0].mxu0 %v324
    %v360 = vpop.f32.mrb[0].mxu0
    %v361 = vadd.f32 0.0, %v360
    %v362 = vpop.f32.mrb[0].mxu0
    %v363 = vpop.f32.mrb[0].mxu0
    %v364 = vpop.f32.mrb[0].mxu0
    %365 = vdwg.mxu0
    %v366 = vadd.f32 %v321, %v361
    %v367 = vtanh.pop %v366
    %s368 = scalar_lea.vmem [#allocation2], 24
    %v369 = vld [vmem:[%s368] sm:$0xff]
    %v370 = vpack.c.bf16 %v367, %v367
    %v372 = vsel %vm201, %v370, 0
    %374 = vmatprep.subr.bf16.mxu0 0
    %375 = vmatpush1.bf16.msra.mxu0 %v223
    %376 = vmatprep.subr.bf16.mxu0 0
    %377 = vmatpush1.bf16.msra.mxu0 %v224
    %378 = vmatprep.subr.bf16.mxu0 0
    %379 = vmatpush1.bf16.msra.mxu0 0
    %380 = vmatprep.subr.bf16.mxu0 0
    %381 = vmatpush1.bf16.msra.mxu0 0
    %382 = vmatprep.subr.bf16.mxu0 0
    %383 = vmatpush1.bf16.msra.mxu0 0
    %384 = vmatprep.subr.bf16.mxu0 0
    %385 = vmatpush1.bf16.msra.mxu0 0
    %386 = vmatprep.subr.bf16.mxu0 0
    %387 = vmatpush1.bf16.msra.mxu0 0
    %388 = vmatprep.subr.bf16.mxu0 0
    %389 = vmatpush1.bf16.msra.mxu0 0
    %390 = vmatprep.subr.bf16.mxu0 0
    %391 = vmatpush1.bf16.msra.mxu0 0
    %392 = vmatprep.subr.bf16.mxu0 0
    %393 = vmatpush1.bf16.msra.mxu0 0
    %394 = vmatprep.subr.bf16.mxu0 0
    %395 = vmatpush1.bf16.msra.mxu0 0
    %396 = vmatprep.subr.bf16.mxu0 0
    %397 = vmatpush1.bf16.msra.mxu0 0
    %398 = vmatprep.subr.bf16.mxu0 0
    %399 = vmatpush1.bf16.msra.mxu0 0
    %400 = vmatprep.subr.bf16.mxu0 0
    %401 = vmatpush1.bf16.msra.mxu0 0
    %402 = vmatprep.subr.bf16.mxu0 0
    %403 = vmatpush1.bf16.msra.mxu0 0
    %404 = vmatprep.subr.bf16.mxu0 0
    %405 = vmatpush1.bf16.msra.mxu0 0
    %406 = vmatprep.mubr.bf16.mxu0 0
    %407 = vmatmul.mubr.bf16.gmra.mrb[0].mxu0 %v372
    %v408 = vpop.f32.mrb[0].mxu0
    %v409 = vadd.f32 0.0, %v408
    %v410 = vpop.f32.mrb[0].mxu0
    %v411 = vpop.f32.mrb[0].mxu0
    %v412 = vpop.f32.mrb[0].mxu0
    %413 = vdwg.mxu0
    %v414 = vadd.f32 %v369, %v409
    %v415 = vtanh.pop %v414
    %s416 = scalar_lea.vmem [#allocation2], 32
    %v417 = vld [vmem:[%s416] sm:$0xff]
    %v418 = vpack.c.bf16 %v415, %v415
    %v420 = vsel %vm201, %v418, 0
    %422 = vmatprep.subr.bf16.mxu0 0
    %423 = vmatpush1.bf16.msra.mxu0 %v223
    %424 = vmatprep.subr.bf16.mxu0 0
    %425 = vmatpush1.bf16.msra.mxu0 %v224
    %426 = vmatprep.subr.bf16.mxu0 0
    %427 = vmatpush1.bf16.msra.mxu0 0
    %428 = vmatprep.subr.bf16.mxu0 0
    %429 = vmatpush1.bf16.msra.mxu0 0
    %430 = vmatprep.subr.bf16.mxu0 0
    %431 = vmatpush1.bf16.msra.mxu0 0
    %432 = vmatprep.subr.bf16.mxu0 0
    %433 = vmatpush1.bf16.msra.mxu0 0
    %434 = vmatprep.subr.bf16.mxu0 0
    %435 = vmatpush1.bf16.msra.mxu0 0
    %436 = vmatprep.subr.bf16.mxu0 0
    %437 = vmatpush1.bf16.msra.mxu0 0
    %438 = vmatprep.subr.bf16.mxu0 0
    %439 = vmatpush1.bf16.msra.mxu0 0
    %440 = vmatprep.subr.bf16.mxu0 0
    %441 = vmatpush1.bf16.msra.mxu0 0
    %442 = vmatprep.subr.bf16.mxu0 0
    %443 = vmatpush1.bf16.msra.mxu0 0
    %444 = vmatprep.subr.bf16.mxu0 0
    %445 = vmatpush1.bf16.msra.mxu0 0
    %446 = vmatprep.subr.bf16.mxu0 0
    %447 = vmatpush1.bf16.msra.mxu0 0
    %448 = vmatprep.subr.bf16.mxu0 0
    %449 = vmatpush1.bf16.msra.mxu0 0
    %450 = vmatprep.subr.bf16.mxu0 0
    %451 = vmatpush1.bf16.msra.mxu0 0
    %452 = vmatprep.subr.bf16.mxu0 0
    %453 = vmatpush1.bf16.msra.mxu0 0
    %454 = vmatprep.mubr.bf16.mxu0 0
    %455 = vmatmul.mubr.bf16.gmra.mrb[0].mxu0 %v420
    %v456 = vpop.f32.mrb[0].mxu0
    %v457 = vadd.f32 0.0, %v456
    %v458 = vpop.f32.mrb[0].mxu0
    %v459 = vpop.f32.mrb[0].mxu0
    %v460 = vpop.f32.mrb[0].mxu0
    %461 = vdwg.mxu0
    %v462 = vadd.f32 %v417, %v457
    %v463 = vtanh.pop %v462
    %s464 = scalar_lea.vmem [#allocation2], 40
    %v465 = vld [vmem:[%s464] sm:$0xff]
    %v466 = vpack.c.bf16 %v463, %v463
    %v468 = vsel %vm201, %v466, 0
    %470 = vmatprep.subr.bf16.mxu0 0
    %471 = vmatpush1.bf16.msra.mxu0 %v223
    %472 = vmatprep.subr.bf16.mxu0 0
    %473 = vmatpush1.bf16.msra.mxu0 %v224
    %474 = vmatprep.subr.bf16.mxu0 0
    %475 = vmatpush1.bf16.msra.mxu0 0
    %476 = vmatprep.subr.bf16.mxu0 0
    %477 = vmatpush1.bf16.msra.mxu0 0
    %478 = vmatprep.subr.bf16.mxu0 0
    %479 = vmatpush1.bf16.msra.mxu0 0
    %480 = vmatprep.subr.bf16.mxu0 0
    %481 = vmatpush1.bf16.msra.mxu0 0
    %482 = vmatprep.subr.bf16.mxu0 0
    %483 = vmatpush1.bf16.msra.mxu0 0
    %484 = vmatprep.subr.bf16.mxu0 0
    %485 = vmatpush1.bf16.msra.mxu0 0
    %486 = vmatprep.subr.bf16.mxu0 0
    %487 = vmatpush1.bf16.msra.mxu0 0
    %488 = vmatprep.subr.bf16.mxu0 0
    %489 = vmatpush1.bf16.msra.mxu0 0
    %490 = vmatprep.subr.bf16.mxu0 0
    %491 = vmatpush1.bf16.msra.mxu0 0
    %492 = vmatprep.subr.bf16.mxu0 0
    %493 = vmatpush1.bf16.msra.mxu0 0
    %494 = vmatprep.subr.bf16.mxu0 0
    %495 = vmatpush1.bf16.msra.mxu0 0
    %496 = vmatprep.subr.bf16.mxu0 0
    %497 = vmatpush1.bf16.msra.mxu0 0
    %498 = vmatprep.subr.bf16.mxu0 0
    %499 = vmatpush1.bf16.msra.mxu0 0
    %500 = vmatprep.subr.bf16.mxu0 0
    %501 = vmatpush1.bf16.msra.mxu0 0
    %502 = vmatprep.mubr.bf16.mxu0 0
    %503 = vmatmul.mubr.bf16.gmra.mrb[0].mxu0 %v468
    %v504 = vpop.f32.mrb[0].mxu0
    %v505 = vadd.f32 0.0, %v504
    %v506 = vpop.f32.mrb[0].mxu0
    %v507 = vpop.f32.mrb[0].mxu0
    %v508 = vpop.f32.mrb[0].mxu0
    %509 = vdwg.mxu0
    %v510 = vadd.f32 %v465, %v505
    %v511 = vtanh.pop %v510
    %s512 = scalar_lea.vmem [#allocation2], 48
    %v513 = vld [vmem:[%s512] sm:$0xff]
    %v514 = vpack.c.bf16 %v511, %v511
    %v516 = vsel %vm201, %v514, 0
    %518 = vmatprep.subr.bf16.mxu0 0
    %519 = vmatpush1.bf16.msra.mxu0 %v223
    %520 = vmatprep.subr.bf16.mxu0 0
    %521 = vmatpush1.bf16.msra.mxu0 %v224
    %522 = vmatprep.subr.bf16.mxu0 0
    %523 = vmatpush1.bf16.msra.mxu0 0
    %524 = vmatprep.subr.bf16.mxu0 0
    %525 = vmatpush1.bf16.msra.mxu0 0
    %526 = vmatprep.subr.bf16.mxu0 0
    %527 = vmatpush1.bf16.msra.mxu0 0
    %528 = vmatprep.subr.bf16.mxu0 0
    %529 = vmatpush1.bf16.msra.mxu0 0
    %530 = vmatprep.subr.bf16.mxu0 0
    %531 = vmatpush1.bf16.msra.mxu0 0
    %532 = vmatprep.subr.bf16.mxu0 0
    %533 = vmatpush1.bf16.msra.mxu0 0
    %534 = vmatprep.subr.bf16.mxu0 0
    %535 = vmatpush1.bf16.msra.mxu0 0
    %536 = vmatprep.subr.bf16.mxu0 0
    %537 = vmatpush1.bf16.msra.mxu0 0
    %538 = vmatprep.subr.bf16.mxu0 0
    %539 = vmatpush1.bf16.msra.mxu0 0
    %540 = vmatprep.subr.bf16.mxu0 0
    %541 = vmatpush1.bf16.msra.mxu0 0
    %542 = vmatprep.subr.bf16.mxu0 0
    %543 = vmatpush1.bf16.msra.mxu0 0
    %544 = vmatprep.subr.bf16.mxu0 0
    %545 = vmatpush1.bf16.msra.mxu0 0
    %546 = vmatprep.subr.bf16.mxu0 0
    %547 = vmatpush1.bf16.msra.mxu0 0
    %548 = vmatprep.subr.bf16.mxu0 0
    %549 = vmatpush1.bf16.msra.mxu0 0
    %550 = vmatprep.mubr.bf16.mxu0 0
    %551 = vmatmul.mubr.bf16.gmra.mrb[0].mxu0 %v516
    %v552 = vpop.f32.mrb[0].mxu0
    %v553 = vadd.f32 0.0, %v552
    %v554 = vpop.f32.mrb[0].mxu0
    %v555 = vpop.f32.mrb[0].mxu0
    %v556 = vpop.f32.mrb[0].mxu0
    %557 = vdwg.mxu0
    %v558 = vadd.f32 %v513, %v553
    %v559 = vtanh.pop %v558
    %s560 = scalar_lea.vmem [#allocation2], 56
    %v561 = vld [vmem:[%s560] sm:$0xff]
    %v562 = vpack.c.bf16 %v559, %v559
    %v564 = vsel %vm201, %v562, 0
    %566 = vmatprep.subr.bf16.mxu0 0
    %567 = vmatpush1.bf16.msra.mxu0 %v223
    %568 = vmatprep.subr.bf16.mxu0 0
    %569 = vmatpush1.bf16.msra.mxu0 %v224
    %570 = vmatprep.subr.bf16.mxu0 0
    %571 = vmatpush1.bf16.msra.mxu0 0
    %572 = vmatprep.subr.bf16.mxu0 0
    %573 = vmatpush1.bf16.msra.mxu0 0
    %574 = vmatprep.subr.bf16.mxu0 0
    %575 = vmatpush1.bf16.msra.mxu0 0
    %576 = vmatprep.subr.bf16.mxu0 0
    %577 = vmatpush1.bf16.msra.mxu0 0
    %578 = vmatprep.subr.bf16.mxu0 0
    %579 = vmatpush1.bf16.msra.mxu0 0
    %580 = vmatprep.subr.bf16.mxu0 0
    %581 = vmatpush1.bf16.msra.mxu0 0
    %582 = vmatprep.subr.bf16.mxu0 0
    %583 = vmatpush1.bf16.msra.mxu0 0
    %584 = vmatprep.subr.bf16.mxu0 0
    %585 = vmatpush1.bf16.msra.mxu0 0
    %586 = vmatprep.subr.bf16.mxu0 0
    %587 = vmatpush1.bf16.msra.mxu0 0
    %588 = vmatprep.subr.bf16.mxu0 0
    %589 = vmatpush1.bf16.msra.mxu0 0
    %590 = vmatprep.subr.bf16.mxu0 0
    %591 = vmatpush1.bf16.msra.mxu0 0
    %592 = vmatprep.subr.bf16.mxu0 0
    %593 = vmatpush1.bf16.msra.mxu0 0
    %594 = vmatprep.subr.bf16.mxu0 0
    %595 = vmatpush1.bf16.msra.mxu0 0
    %596 = vmatprep.subr.bf16.mxu0 0
    %597 = vmatpush1.bf16.msra.mxu0 0
    %598 = vmatprep.mubr.bf16.mxu0 0
    %599 = vmatmul.mubr.bf16.gmra.mrb[0].mxu0 %v564
    %v600 = vpop.f32.mrb[0].mxu0
    %v601 = vadd.f32 0.0, %v600
    %v602 = vpop.f32.mrb[0].mxu0
    %v603 = vpop.f32.mrb[0].mxu0
    %v604 = vpop.f32.mrb[0].mxu0
    %605 = vdwg.mxu0
    %v606 = vadd.f32 %v561, %v601
    %v607 = vtanh.pop %v606
    %v608 = vpack.c.bf16 %v607, %v607
    %v609 = vld [vmem:[#allocation9] sm:$0xf]
    %v610 = vld [vmem:[#allocation9 + $0x4] sm:$0xf]
    %v611 = vld [vmem:[#allocation9 + $0x8] sm:$0xf]
    %v612 = vld [vmem:[#allocation9 + $0xc] sm:$0xf]
    %v613 = vld [vmem:[%s5] sm:$0x1]
    %v615 = vlaneseq
    %v616 = vshrl.u32 %v615, 7
    %v617 = vsub.s32 0, %v616
    %v618 = vrot.slane %v613, %v617
    %v624 = vunpack.c.l.b16 %v609
    %v625 = vunpack.c.l.b16 %v610
    %v626 = vunpack.c.l.b16 %v611
    %v627 = vunpack.c.l.b16 %v612
    %v628 = vpack.c.b16 %v625, %v624
    %v629 = vpack.c.b16 %v627, %v626
    %v633 = vsel %vm201, %v608, 0
    %635 = vmatprep.subr.bf16.mxu0 0
    %636 = vmatpush1.bf16.msra.mxu0 %v628
    %637 = vmatprep.subr.bf16.mxu0 0
    %638 = vmatpush1.bf16.msra.mxu0 %v629
    %639 = vmatprep.subr.bf16.mxu0 0
    %640 = vmatpush1.bf16.msra.mxu0 0
    %641 = vmatprep.subr.bf16.mxu0 0
    %642 = vmatpush1.bf16.msra.mxu0 0
    %643 = vmatprep.subr.bf16.mxu0 0
    %644 = vmatpush1.bf16.msra.mxu0 0
    %645 = vmatprep.subr.bf16.mxu0 0
    %646 = vmatpush1.bf16.msra.mxu0 0
    %647 = vmatprep.subr.bf16.mxu0 0
    %648 = vmatpush1.bf16.msra.mxu0 0
    %649 = vmatprep.subr.bf16.mxu0 0
    %650 = vmatpush1.bf16.msra.mxu0 0
    %651 = vmatprep.subr.bf16.mxu0 0
    %652 = vmatpush1.bf16.msra.mxu0 0
    %653 = vmatprep.subr.bf16.mxu0 0
    %654 = vmatpush1.bf16.msra.mxu0 0
    %655 = vmatprep.subr.bf16.mxu0 0
    %656 = vmatpush1.bf16.msra.mxu0 0
    %657 = vmatprep.subr.bf16.mxu0 0
    %658 = vmatpush1.bf16.msra.mxu0 0
    %659 = vmatprep.subr.bf16.mxu0 0
    %660 = vmatpush1.bf16.msra.mxu0 0
    %661 = vmatprep.subr.bf16.mxu0 0
    %662 = vmatpush1.bf16.msra.mxu0 0
    %663 = vmatprep.subr.bf16.mxu0 0
    %664 = vmatpush1.bf16.msra.mxu0 0
    %665 = vmatprep.subr.bf16.mxu0 0
    %666 = vmatpush1.bf16.msra.mxu0 0
    %667 = vmatprep.mubr.bf16.mxu0 0
    %668 = vmatmul.mubr.bf16.gmra.mrb[0].mxu0 %v633
    %v669 = vpop.f32.mrb[0].mxu0
    %v670 = vadd.f32 %v618, %v669
    %v671 = vpop.f32.mrb[0].mxu0
    %v672 = vpop.f32.mrb[0].mxu0
    %v673 = vpop.f32.mrb[0].mxu0
    %674 = vdwg.mxu0
    %675 = vst [vmem:[#allocation11] sm:$0xff] %v670
    // Predicated region
    $region42: #{tpu_custom_call.1} parent=1 // pred_check
      _
    $region43: #{tpu_custom_call.1} parent=1 // pred_check_branch
      %677 = sbr.rel (0) target = $region45
    $region44: #{tpu_custom_call.1} parent=1 // pred_region
      %s679 = ssub.s32 128, 128
      %680 = vsyncadd [#allocation5], %s679
      %s682 = sshll.u32 [#allocation11], 4
      %s683 = int_to_ptr.vmem [resolvable:$true] %s682
      %685 = dma.vmem_to_hbm [thread:$0]  %s683, 128, %s6, [#allocation5]
    $region45: #{tpu_custom_call.1} parent=1 // pred_fallthru
      _
    // Predicated region
    $region46: #{tpu_custom_call.1} parent=1 // pred_check
      _
    $region47: #{tpu_custom_call.1} parent=1 // pred_check_branch
      %687 = sbr.rel (0) target = $region49
    $region48: #{tpu_custom_call.1} parent=1 // pred_region
      %688 = dma.done [#allocation5], 128
    $region49: #{tpu_custom_call.1} parent=1 // pred_fallthru
      _
    %689 = vsyncpa [#allocation4], 1
    %690 = vsyncpa [#allocation7], 1
    %691 = vsyncpa [#allocation10], 1
    %692 = vsyncpa [#allocation5], 1

</llo_original>
